<compile_context>
chip_gen: v6e
topology: v6e:2x2x1
jax: 0.10.0
libtpu: 0.0.40
codegen_flags: <defaults>
</compile_context>

<pallas_src>
import jax
import jax.numpy as jnp
from jax.experimental import pallas as pl
from jax.experimental.pallas import tpu as pltpu


def _round_up(x, m):
    return (x + m - 1) // m * m


def _decoder_kernel(zy_ref, w1_ref, b1_ref, w2_ref, b2_ref, out_ref):
    # Layer 1: single fused matmul over the concatenated [z | y] tile.
    # bf16 operands, f32 MXU accumulation; bias add in f32.
    h = jnp.dot(zy_ref[...], w1_ref[...], preferred_element_type=jnp.float32)
    h = h + b1_ref[...]
    # Softplus (nn.Softplus, beta=1): stable log(1 + exp(h)), kept in f32.
    h = jnp.logaddexp(h, 0.0)
    # Layer 2: bf16 operands, f32 accumulation, f32 bias.
    o = jnp.dot(h.astype(jnp.bfloat16), w2_ref[...], preferred_element_type=jnp.float32)
    o = o + b2_ref[...]
    # Sigmoid via one EUP tanh: sigmoid(x) = 0.5 * (tanh(x/2) + 1).
    out_ref[...] = 0.5 * (jnp.tanh(0.5 * o) + 1.0)


def decoder_forward(z, y, params, *, batch_tile=512):
    """z: (B, embeddingsz) f32, y: (B, numclass) f32 -> (B, inputsz) f32.

    params = (w1, b1, w2, b2):
      w1: (numclass+embeddingsz, hiddensz), b1: (hiddensz,),
      w2: (hiddensz, inputsz),              b2: (inputsz,),
    weights stored transposed (in_features, out_features) so the kernel computes x @ W.
    """
    w1, b1, w2, b2 = params
    B = z.shape[0]
    fan_in1, H = w1.shape
    N = w2.shape[1]

    # Hidden dim padded to 128 lanes (lane-dense layer-1 output / layer-2 input).
    # Padded hidden columns get b1=0 -> softplus=log 2, but the matching W2 rows are
    # zero-padded so they contribute nothing to the output.
    H_pad = _round_up(H, 128)

    # Batch tile: multiple of 16 (bf16 sublane packing), sized so the grid has >= 2
    # "parallel" steps whenever possible (v7x megacore), capped so resident weights
    # plus double-buffered batch tiles stay well within VMEM.
    TB = min(batch_tile, 512, _round_up(pl.cdiv(B, 2), 16))
    TB = max(16, _round_up(TB, 16))
    grid = (pl.cdiv(B, TB),)  # ragged last block: masked loads/stores, no host batch pad

    # Fold cat([z, y]) into one operand (one K=fan_in1 matmul); cast matmul operands to bf16.
    zy = jnp.concatenate([z, y], axis=1).astype(jnp.bfloat16)

    w1p = jnp.pad(w1, ((0, 0), (0, H_pad - H))).astype(jnp.bfloat16)
    b1p = jnp.pad(b1, (0, H_pad - H)).reshape(1, H_pad).astype(jnp.float32)
    w2p = jnp.pad(w2, ((0, H_pad - H), (0, 0))).astype(jnp.bfloat16)
    b2p = b2.reshape(1, N).astype(jnp.float32)

    cost = pl.CostEstimate(
        flops=2 * B * (fan_in1 * H_pad + H_pad * N),
        transcendentals=B * (2 * H_pad + N),
        bytes_accessed=(zy.size * 2 + w1p.size * 2 + w2p.size * 2
                        + b1p.size * 4 + b2p.size * 4 + B * N * 4),
    )

    out = pl.pallas_call(
        _decoder_kernel,
        out_shape=jax.ShapeDtypeStruct((B, N), jnp.float32),
        grid=grid,
        in_specs=[
            pl.BlockSpec((TB, fan_in1), lambda i: (i, 0)),     # zy: batch-tiled, pipelined
            pl.BlockSpec((fan_in1, H_pad), lambda i: (0, 0)),  # W1: resident (constant index_map)
            pl.BlockSpec((1, H_pad), lambda i: (0, 0)),        # b1: resident
            pl.BlockSpec((H_pad, N), lambda i: (0, 0)),        # W2: resident, full N extent
            pl.BlockSpec((1, N), lambda i: (0, 0)),            # b2: resident
        ],
        # Output block's last dim == full array dim -> kernel writes the unpadded
        # result directly; no post-kernel slice pass.
        out_specs=pl.BlockSpec((TB, N), lambda i: (i, 0)),
        compiler_params=pltpu.CompilerParams(
            dimension_semantics=("parallel",),      # shards batch tiles over v7x's 2 TCs
            vmem_limit_bytes=32 * 1024 * 1024,      # safe on v5e/v6e/v7x at these sizes
        ),
        cost_estimate=cost,
    )(zy, w1p, b1p, w2p, b2p)

    return out  # already (B, inputsz); nothing to slice off


def init_decoder_params(key, inputsz, numclass, hiddensz, embeddingsz):
    """Deterministic init mimicking nn.Linear's default U(-1/sqrt(fan_in), +1/sqrt(fan_in)).
    Weights stored transposed (in_features, out_features); layer-1 rows are ordered
    [z-part ; y-part] to match torch.cat((z, y), dim=1)."""
    k1, k2, k3, k4 = jax.random.split(key, 4)
    fan_in1 = numclass + embeddingsz
    bound1 = 1.0 / (fan_in1 ** 0.5)
    w1 = jax.random.uniform(k1, (fan_in1, hiddensz), jnp.float32, -bound1, bound1)
    b1 = jax.random.uniform(k2, (hiddensz,), jnp.float32, -bound1, bound1)
    bound2 = 1.0 / (hiddensz ** 0.5)
    w2 = jax.random.uniform(k3, (hiddensz, inputsz), jnp.float32, -bound2, bound2)
    b2 = jax.random.uniform(k4, (inputsz,), jnp.float32, -bound2, bound2)
    return (w1, b1, w2, b2)


def decoder_reference_f32(z, y, params):
    """Pure-f32 JAX reference matching the PyTorch forward exactly."""
    w1, b1, w2, b2 = params
    zy = jnp.concatenate([z, y], axis=1)
    h = jax.nn.softplus(zy @ w1 + b1)
    return jax.nn.sigmoid(h @ w2 + b2)


def decoder_reference_bf16(z, y, params):
    """Reference mirroring the kernel's bf16 matmuls / f32 accumulation / tanh-sigmoid."""
    w1, b1, w2, b2 = params
    zy = jnp.concatenate([z, y], axis=1).astype(jnp.bfloat16)
    h = jnp.dot(zy, w1.astype(jnp.bfloat16), preferred_element_type=jnp.float32) + b1
    h = jnp.logaddexp(h, 0.0)
    o = jnp.dot(h.astype(jnp.bfloat16), w2.astype(jnp.bfloat16),
                preferred_element_type=jnp.float32) + b2
    return 0.5 * (jnp.tanh(0.5 * o) + 1.0)


if __name__ == "__main__":
    # Small, forward-consistent shapes.
    batch = 8
    inputsz = 64        # e.g. flattened image size
    numclass = 10
    hiddensz = 32
    embeddingsz = 16

    key = jax.random.PRNGKey(0)
    kz, ky, kp = jax.random.split(key, 3)

    z = jax.random.normal(kz, (batch, embeddingsz), jnp.float32)
    # y is a one-hot class label batch (typical SSL-VAE usage).
    labels = jax.random.randint(ky, (batch,), 0, numclass)
    y = jax.nn.one_hot(labels, numclass, dtype=jnp.float32)

    params = init_decoder_params(kp, inputsz, numclass, hiddensz, embeddingsz)

    out = decoder_forward(z, y, params)
    out = jax.block_until_ready(out)

    assert out.shape == (batch, inputsz)
    ref_bf16 = decoder_reference_bf16(z, y, params)
    ref_f32 = decoder_reference_f32(z, y, params)
    assert jnp.allclose(out, ref_bf16, atol=1e-4, rtol=1e-4), "mismatch vs bf16-faithful reference"
    assert jnp.allclose(out, ref_f32, atol=2e-2, rtol=2e-2), "mismatch vs f32 reference"

    print("KERNEL_OK")
</pallas_src>

<mosaic_0001>
module attributes {stable_mosaic.version = 11 : i64} {
  func.func @_decoder_kernel(%arg0: i32, %arg1: memref<16x26xbf16, #tpu.memory_space<vmem>>, %arg2: memref<26x128xbf16, #tpu.memory_space<vmem>>, %arg3: memref<1x128xf32, #tpu.memory_space<vmem>>, %arg4: memref<128x64xbf16, #tpu.memory_space<vmem>>, %arg5: memref<1x64xf32, #tpu.memory_space<vmem>>, %arg6: memref<16x64xf32, #tpu.memory_space<vmem>>) attributes {dimension_semantics = [#tpu.dimension_semantics<parallel>], iteration_bounds = array<i64: 1>, scalar_prefetch = 0 : i64, scratch_operands = 0 : i64, tpu.core_type = #tpu.core_type<tc>, window_params = [{transform_indices = @transform_0, window_bounds = array<i64: 16, 26>}, {pipeline_mode = #tpu.pipeline_mode<synchronous>, transform_indices = @transform_1, window_bounds = array<i64: 26, 128>}, {pipeline_mode = #tpu.pipeline_mode<synchronous>, transform_indices = @transform_2, window_bounds = array<i64: 1, 128>}, {pipeline_mode = #tpu.pipeline_mode<synchronous>, transform_indices = @transform_3, window_bounds = array<i64: 128, 64>}, {pipeline_mode = #tpu.pipeline_mode<synchronous>, transform_indices = @transform_4, window_bounds = array<i64: 1, 64>}, {transform_indices = @transform_5, window_bounds = array<i64: 16, 64>}]} {
    %c0 = arith.constant 0 : index
    %c0_0 = arith.constant 0 : index
    %0 = vector.load %arg1[%c0, %c0_0] : memref<16x26xbf16, #tpu.memory_space<vmem>>, vector<16x26xbf16>
    %c0_1 = arith.constant 0 : index
    %c0_2 = arith.constant 0 : index
    %1 = vector.load %arg2[%c0_1, %c0_2] : memref<26x128xbf16, #tpu.memory_space<vmem>>, vector<26x128xbf16>
    %cst = arith.constant dense<0.000000e+00> : vector<16x128xf32>
    %2 = tpu.matmul %0, %1, %cst {dimension_numbers = #tpu.dot_dimension_numbers<[1], [0], [0], [1], [0, 0, 1, 1], [], []>} : vector<16x26xbf16>, vector<26x128xbf16>, vector<16x128xf32> -> vector<16x128xf32>
    %c0_3 = arith.constant 0 : index
    %c0_4 = arith.constant 0 : index
    %3 = vector.load %arg3[%c0_3, %c0_4] : memref<1x128xf32, #tpu.memory_space<vmem>>, vector<1x128xf32>
    %4 = vector.broadcast %3 : vector<1x128xf32> to vector<16x128xf32>
    %5 = arith.addf %2, %4 : vector<16x128xf32>
    %cst_5 = arith.constant 0.000000e+00 : f32
    %6 = vector.broadcast %cst_5 : f32 to vector<16x128xf32>
    %7 = arith.maximumf %5, %6 : vector<16x128xf32>
    %8 = vector.broadcast %cst_5 : f32 to vector<16x128xf32>
    %9 = arith.subf %5, %8 : vector<16x128xf32>
    %10 = arith.cmpf one, %9, %9 : vector<16x128xf32>
    %11 = vector.broadcast %cst_5 : f32 to vector<16x128xf32>
    %12 = arith.addf %5, %11 : vector<16x128xf32>
    %13 = math.absf %9 : vector<16x128xf32>
    %cst_6 = arith.constant 0.000000e+00 : f32
    %14 = vector.broadcast %cst_6 : f32 to vector<16x128xf32>
    %15 = arith.subf %14, %13 : vector<16x128xf32>
    %16 = math.exp %15 : vector<16x128xf32>
    %17 = math.log1p %16 : vector<16x128xf32>
    %18 = arith.addf %7, %17 : vector<16x128xf32>
    %19 = arith.select %10, %12, %18 : vector<16x128xi1>, vector<16x128xf32>
    %20 = arith.truncf %19 : vector<16x128xf32> to vector<16x128xbf16>
    %c0_7 = arith.constant 0 : index
    %c0_8 = arith.constant 0 : index
    %21 = vector.load %arg4[%c0_7, %c0_8] : memref<128x64xbf16, #tpu.memory_space<vmem>>, vector<128x64xbf16>
    %cst_9 = arith.constant dense<0.000000e+00> : vector<16x64xf32>
    %22 = tpu.matmul %20, %21, %cst_9 {dimension_numbers = #tpu.dot_dimension_numbers<[1], [0], [0], [1], [0, 0, 1, 1], [], []>} : vector<16x128xbf16>, vector<128x64xbf16>, vector<16x64xf32> -> vector<16x64xf32>
    %c0_10 = arith.constant 0 : index
    %c0_11 = arith.constant 0 : index
    %23 = vector.load %arg5[%c0_10, %c0_11] : memref<1x64xf32, #tpu.memory_space<vmem>>, vector<1x64xf32>
    %24 = vector.broadcast %23 : vector<1x64xf32> to vector<16x64xf32>
    %25 = arith.addf %22, %24 : vector<16x64xf32>
    %cst_12 = arith.constant 5.000000e-01 : f32
    %26 = vector.broadcast %cst_12 : f32 to vector<16x64xf32>
    %27 = arith.mulf %26, %25 : vector<16x64xf32>
    %28 = math.tanh %27 : vector<16x64xf32>
    %cst_13 = arith.constant 1.000000e+00 : f32
    %29 = vector.broadcast %cst_13 : f32 to vector<16x64xf32>
    %30 = arith.addf %28, %29 : vector<16x64xf32>
    %cst_14 = arith.constant 5.000000e-01 : f32
    %31 = vector.broadcast %cst_14 : f32 to vector<16x64xf32>
    %32 = arith.mulf %31, %30 : vector<16x64xf32>
    %c0_15 = arith.constant 0 : index
    %c0_16 = arith.constant 0 : index
    %33 = vector.load %arg6[%c0_15, %c0_16] : memref<16x64xf32, #tpu.memory_space<vmem>>, vector<16x64xf32>
    tpu.vector_store %arg6[%c0_15, %c0_16], %32 {strides = array<i32>} : memref<16x64xf32, #tpu.memory_space<vmem>>, vector<16x64xf32>,
    return
  }
  func.func @transform_0(%arg0: i32) -> (i32, i32) {
    %c0_i32 = arith.constant 0 : i32
    %c0_i32_0 = arith.constant 0 : i32
    return %arg0, %c0_i32 : i32, i32
  }
  func.func @transform_1(%arg0: i32) -> (i32, i32) {
    %c0_i32 = arith.constant 0 : i32
    %c0_i32_0 = arith.constant 0 : i32
    %c0_i32_1 = arith.constant 0 : i32
    return %c0_i32, %c0_i32_0 : i32, i32
  }
  func.func @transform_2(%arg0: i32) -> (i32, i32) {
    %c0_i32 = arith.constant 0 : i32
    %c0_i32_0 = arith.constant 0 : i32
    %c0_i32_1 = arith.constant 0 : i32
    return %c0_i32, %c0_i32_0 : i32, i32
  }
  func.func @transform_3(%arg0: i32) -> (i32, i32) {
    %c0_i32 = arith.constant 0 : i32
    %c0_i32_0 = arith.constant 0 : i32
    %c0_i32_1 = arith.constant 0 : i32
    return %c0_i32, %c0_i32_0 : i32, i32
  }
  func.func @transform_4(%arg0: i32) -> (i32, i32) {
    %c0_i32 = arith.constant 0 : i32
    %c0_i32_0 = arith.constant 0 : i32
    %c0_i32_1 = arith.constant 0 : i32
    return %c0_i32, %c0_i32_0 : i32, i32
  }
  func.func @transform_5(%arg0: i32) -> (i32, i32) {
    %c0_i32 = arith.constant 0 : i32
    %c0_i32_0 = arith.constant 0 : i32
    return %arg0, %c0_i32 : i32, i32
  }
}

</mosaic_0001>

<llo_original>
// kernel: tpu_custom_call.1
$region0: #{tpu_custom_call.1}
  #allocation0 [shape = 'u32[]', space=smem, size = 0x4, offset = 0x4, fixed_abs, tag = 'smem constant byte address 0x4 - core index']
  #allocation1 [shape = 'u32[144,128]{1,0:T(1,128)}', space=vmem, size = 0x12000, scoped, tag = 'internal scratch']
  %s0 = inlined_call_operand.vmem [shape: bf16[8,26], index: 0, kind: input, shape index: {}]
  %s1 = inlined_call_operand.vmem [shape: bf16[26,128], index: 1, kind: input, shape index: {}]
  %s2 = inlined_call_operand.vmem [shape: f32[1,128], index: 2, kind: input, shape index: {}]
  %s3 = inlined_call_operand.vmem [shape: bf16[128,64], index: 3, kind: input, shape index: {}]
  %s4 = inlined_call_operand.vmem [shape: f32[1,64], index: 4, kind: input, shape index: {}]
  %s5 = inlined_call_operand.hbm [shape: f32[8,64], index: 5, kind: output, shape index: {}]
  %s6 = sld [smem:[#allocation0]]
  $region30: #{tpu_custom_call.1} parent=0
    _
  %s8 = ssub.s32 1, %s6
  %s9 = scalar_select 0, %s8, %s6
  $region1: #{tpu_custom_call.1} parent=0
    #allocation2 [shape = 'u8[8192]{0}', space=vmem, size = 0x2000, scoped, tag = 'output window, operand 0, single buffered']
    #allocation3 [shape = 's32[1]{0}', space=sflag, size = 0x4, scoped, tag = 'scoped memory for tpu_custom_call.1']
    %10 = vsyncpa [#allocation3], 0
    // Predicated region
    $region2: #{tpu_custom_call.1} parent=1 // pred_check
      _
    $region3: #{tpu_custom_call.1} parent=1 // pred_check_branch
      %12 = sbr.rel (0) target = $region5
    $region4: #{tpu_custom_call.1} parent=1 // pred_region
      _
    $region5: #{tpu_custom_call.1} parent=1 // pred_fallthru
      _
    // Predicated region
    $region6: #{tpu_custom_call.1} parent=1 // pred_check
      _
    $region7: #{tpu_custom_call.1} parent=1 // pred_check_branch
      %14 = sbr.rel (0) target = $region9
    $region8: #{tpu_custom_call.1} parent=1 // pred_region
      _
    $region9: #{tpu_custom_call.1} parent=1 // pred_fallthru
      _
    // Predicated region
    $region10: #{tpu_custom_call.1} parent=1 // pred_check
      _
    $region11: #{tpu_custom_call.1} parent=1 // pred_check_branch
      %16 = sbr.rel (0) target = $region13
    $region12: #{tpu_custom_call.1} parent=1 // pred_region
      _
    $region13: #{tpu_custom_call.1} parent=1 // pred_fallthru
      _
    // Predicated region
    $region14: #{tpu_custom_call.1} parent=1 // pred_check
      _
    $region15: #{tpu_custom_call.1} parent=1 // pred_check_branch
      %18 = sbr.rel (0) target = $region17
    $region16: #{tpu_custom_call.1} parent=1 // pred_region
      _
    $region17: #{tpu_custom_call.1} parent=1 // pred_fallthru
      _
    // Predicated region
    $region18: #{tpu_custom_call.1} parent=1 // pred_check
      _
    $region19: #{tpu_custom_call.1} parent=1 // pred_check_branch
      %20 = sbr.rel (0) target = $region21
    $region20: #{tpu_custom_call.1} parent=1 // pred_region
      _
    $region21: #{tpu_custom_call.1} parent=1 // pred_fallthru
      _
    %v22 = vld [vmem:[%s0] sm:$0xf]
    %v23 = vld [vmem:[%s0 + $0x4] sm:$0xf]
    %v24 = vld [vmem:[%s1] sm:$0xf]
    %v25 = vld [vmem:[%s1 + $0x4] sm:$0xf]
    %v26 = vld [vmem:[%s1 + $0x8] sm:$0xf]
    %v27 = vld [vmem:[%s1 + $0xc] sm:$0x1]
    %v28 = vld [vmem:[%s2] sm:$0x1]
    %v30 = vlaneseq
    %v31 = vshrl.u32 %v30, 7
    %v32 = vsub.s32 0, %v31
    %v33 = vrot.slane %v28, %v32
    %v37 = vunpack.c.l.b16 %v22
    %v38 = vunpack.c.l.b16 %v23
    %v39 = vpack.c.b16 %v38, %v37
    %v44 = vunpack.c.l.b16 %v24
    %v45 = vunpack.c.l.b16 %v25
    %v46 = vunpack.c.l.b16 %v26
    %v47 = vunpack.c.l.b16 %v27
    %v48 = vpack.c.b16 %v45, %v44
    %v49 = vpack.c.b16 %v47, %v46
    %vm51 = vcmask 211968
    %v53 = vsel %vm51, %v39, 0
    %vm55 = vcmask 1044480
    %v57 = vsel %vm55, %v49, 0
    %59 = vmatprep.subr.bf16.mxu0 0
    %60 = vmatpush1.bf16.msra.mxu0 0
    %61 = vmatprep.subr.bf16.mxu0 0
    %62 = vmatpush1.bf16.msra.mxu0 0
    %63 = vmatprep.subr.bf16.mxu0 0
    %64 = vmatpush1.bf16.msra.mxu0 0
    %65 = vmatprep.subr.bf16.mxu0 0
    %66 = vmatpush1.bf16.msra.mxu0 0
    %67 = vmatprep.subr.bf16.mxu0 0
    %68 = vmatpush1.bf16.msra.mxu0 0
    %69 = vmatprep.subr.bf16.mxu0 0
    %70 = vmatpush1.bf16.msra.mxu0 0
    %71 = vmatprep.subr.bf16.mxu0 0
    %72 = vmatpush1.bf16.msra.mxu0 %v57
    %73 = vmatprep.subr.bf16.mxu0 0
    %74 = vmatpush1.bf16.msra.mxu0 %v48
    %75 = vmatprep.subr.bf16.mxu0 0
    %76 = vmatpush2.bf16.msra.mxu0 0
    %77 = vmatprep.subr.bf16.mxu0 0
    %78 = vmatpush2.bf16.msra.mxu0 0
    %79 = vmatprep.subr.bf16.mxu0 0
    %80 = vmatpush2.bf16.msra.mxu0 0
    %81 = vmatprep.subr.bf16.mxu0 0
    %82 = vmatpush2.bf16.msra.mxu0 0
    %83 = vmatprep.subr.bf16.mxu0 0
    %84 = vmatpush2.bf16.msra.mxu0 0
    %85 = vmatprep.subr.bf16.mxu0 0
    %86 = vmatpush2.bf16.msra.mxu0 0
    %87 = vmatprep.subr.bf16.mxu0 0
    %88 = vmatpush2.bf16.msra.mxu0 0
    %89 = vmatprep.subr.bf16.mxu0 0
    %90 = vmatpush2.bf16.msra.mxu0 0
    %91 = vmatprep.mubr.bf16.mxu0 0
    %92 = vmatmul.mubr.bf16.gmra.mxu0 %v53
    %v93 = vpop.f32.mrf.mxu0
    %v94 = vadd.f32 %v33, %v93
    %v95 = vpop.f32.mrf.mxu0
    %v96 = vpop.f32.mrf.mxu0
    %v97 = vadd.f32 %v33, %v96
    %v98 = vpop.f32.mrf.mxu0
    %99 = vdwg.mxu0
    %v100 = vmax.f32 %v94, 0.0
    %v101 = vmax.f32 %v97, 0.0
    %vm102 = vcmp.ne.f32.partialorder %v94, %v94
    %vm103 = vcmp.ne.f32.partialorder %v97, %v97
    %v104 = vadd.f32 %v94, 0.0
    %v105 = vadd.f32 %v97, 0.0
    %v106 = vand.u32 2147483647, %v94
    %v107 = vand.u32 2147483647, %v97
    %v108 = vsub.f32 0.0, %v106
    %v109 = vsub.f32 0.0, %v107
    %v110 = vmul.f32 %v108, 1.442695
    %v111 = vpow.pop %v110
    %v112 = vmul.f32 %v109, 1.442695
    %v113 = vpow.pop %v112
    %v114 = vadd.f32 %v111, 1.0
    %v115 = vlog2.pop %v114
    %v116 = vmul.f32 %v115, 0.6931472
    %v117 = vmul.f32 -0.5, %v111
    %v118 = vadd.f32 %v117, 1.0
    %v119 = vmul.f32 %v118, %v111
    %v120 = vand.u32 2147483647, %v111
    %vm121 = vcmp.lt.f32.partialorder %v120, 0.0004427343
    %v122 = vsel %vm121, %v119, %v116
    %v123 = vadd.f32 %v113, 1.0
    %v124 = vlog2.pop %v123
    %v125 = vmul.f32 %v124, 0.6931472
    %v126 = vmul.f32 -0.5, %v113
    %v127 = vadd.f32 %v126, 1.0
    %v128 = vmul.f32 %v127, %v113
    %v129 = vand.u32 2147483647, %v113
    %vm130 = vcmp.lt.f32.partialorder %v129, 0.0004427343
    %v131 = vsel %vm130, %v128, %v125
    %v132 = vadd.f32 %v100, %v122
    %v133 = vadd.f32 %v101, %v131
    %v134 = vsel %vm102, %v104, %v132
    %v135 = vsel %vm103, %v105, %v133
    %v136 = vpack.c.bf16 %v135, %v134
    %v137 = vld [vmem:[%s3] sm:$0xf]
    %v138 = vld [vmem:[%s3 + $0x4] sm:$0xf]
    %v139 = vld [vmem:[%s3 + $0x8] sm:$0xf]
    %v140 = vld [vmem:[%s3 + $0xc] sm:$0xf]
    %v141 = vld [vmem:[%s3 + $0x10] sm:$0xf]
    %v142 = vld [vmem:[%s3 + $0x14] sm:$0xf]
    %v143 = vld [vmem:[%s3 + $0x18] sm:$0xf]
    %v144 = vld [vmem:[%s3 + $0x1c] sm:$0xf]
    %v145 = vld [vmem:[%s3 + $0x20] sm:$0xf]
    %v146 = vld [vmem:[%s3 + $0x24] sm:$0xf]
    %v147 = vld [vmem:[%s3 + $0x28] sm:$0xf]
    %v148 = vld [vmem:[%s3 + $0x2c] sm:$0xf]
    %v149 = vld [vmem:[%s3 + $0x30] sm:$0xf]
    %v150 = vld [vmem:[%s3 + $0x34] sm:$0xf]
    %v151 = vld [vmem:[%s3 + $0x38] sm:$0xf]
    %v152 = vld [vmem:[%s3 + $0x3c] sm:$0xf]
    %v153 = vld [vmem:[%s4] sm:$0x1]
    %v155 = vlaneseq
    %v156 = vshrl.u32 %v155, 7
    %v157 = vsub.s32 0, %v156
    %v158 = vrot.slane %v153, %v157
    %v176 = vunpack.c.l.b16 %v137
    %v177 = vunpack.c.l.b16 %v138
    %v178 = vunpack.c.l.b16 %v139
    %v179 = vunpack.c.l.b16 %v140
    %v180 = vunpack.c.l.b16 %v141
    %v181 = vunpack.c.l.b16 %v142
    %v182 = vunpack.c.l.b16 %v143
    %v183 = vunpack.c.l.b16 %v144
    %v184 = vunpack.c.l.b16 %v145
    %v185 = vunpack.c.l.b16 %v146
    %v186 = vunpack.c.l.b16 %v147
    %v187 = vunpack.c.l.b16 %v148
    %v188 = vunpack.c.l.b16 %v149
    %v189 = vunpack.c.l.b16 %v150
    %v190 = vunpack.c.l.b16 %v151
    %v191 = vunpack.c.l.b16 %v152
    %v192 = vpack.c.b16 %v177, %v176
    %v193 = vpack.c.b16 %v179, %v178
    %v194 = vpack.c.b16 %v181, %v180
    %v195 = vpack.c.b16 %v183, %v182
    %v196 = vpack.c.b16 %v185, %v184
    %v197 = vpack.c.b16 %v187, %v186
    %v198 = vpack.c.b16 %v189, %v188
    %v199 = vpack.c.b16 %v191, %v190
    %208 = vmatprep.subr.bf16.mxu0 0
    %209 = vmatpush1.bf16.msra.mxu0 %v199
    %210 = vmatprep.subr.bf16.mxu0 0
    %211 = vmatpush1.bf16.msra.mxu0 %v198
    %212 = vmatprep.subr.bf16.mxu0 0
    %213 = vmatpush1.bf16.msra.mxu0 %v197
    %214 = vmatprep.subr.bf16.mxu0 0
    %215 = vmatpush1.bf16.msra.mxu0 %v196
    %216 = vmatprep.subr.bf16.mxu0 0
    %217 = vmatpush1.bf16.msra.mxu0 %v195
    %218 = vmatprep.subr.bf16.mxu0 0
    %219 = vmatpush1.bf16.msra.mxu0 %v194
    %220 = vmatprep.subr.bf16.mxu0 0
    %221 = vmatpush1.bf16.msra.mxu0 %v193
    %222 = vmatprep.subr.bf16.mxu0 0
    %223 = vmatpush1.bf16.msra.mxu0 %v192
    %224 = vmatprep.subr.bf16.mxu0 0
    %225 = vmatpush2.bf16.msra.mxu0 0
    %226 = vmatprep.subr.bf16.mxu0 0
    %227 = vmatpush2.bf16.msra.mxu0 0
    %228 = vmatprep.subr.bf16.mxu0 0
    %229 = vmatpush2.bf16.msra.mxu0 0
    %230 = vmatprep.subr.bf16.mxu0 0
    %231 = vmatpush2.bf16.msra.mxu0 0
    %232 = vmatprep.subr.bf16.mxu0 0
    %233 = vmatpush2.bf16.msra.mxu0 0
    %234 = vmatprep.subr.bf16.mxu0 0
    %235 = vmatpush2.bf16.msra.mxu0 0
    %236 = vmatprep.subr.bf16.mxu0 0
    %237 = vmatpush2.bf16.msra.mxu0 0
    %238 = vmatprep.subr.bf16.mxu0 0
    %239 = vmatpush2.bf16.msra.mxu0 0
    %240 = vmatprep.mubr.bf16.mxu0 0
    %241 = vmatmul.mubr.bf16.gmra.mxu0 %v136
    %v242 = vpop.f32.mrf.mxu0
    %v243 = vadd.f32 %v158, %v242
    %v244 = vpop.f32.mrf.mxu0
    %v245 = vpop.f32.mrf.mxu0
    %v246 = vadd.f32 %v158, %v245
    %v247 = vpop.f32.mrf.mxu0
    %248 = vdwg.mxu0
    %v249 = vmul.f32 %v243, 0.5
    %v250 = vmul.f32 %v246, 0.5
    %v251 = vtanh.pop %v249
    %v252 = vtanh.pop %v250
    %v253 = vadd.f32 %v251, 1.0
    %v254 = vadd.f32 %v252, 1.0
    %v255 = vmul.f32 %v253, 0.5
    %v256 = vmul.f32 %v254, 0.5
    %vm257 = vcmask 523264
    %258 = vst.msk [vmem:[#allocation2] sm:$0xff] %vm257, %v255
    %259 = vst.msk [vmem:[#allocation2 + $0x8] sm:$0xff] %vm257, %v256
    // Predicated region
    $region22: #{tpu_custom_call.1} parent=1 // pred_check
      _
    $region23: #{tpu_custom_call.1} parent=1 // pred_check_branch
      %261 = sbr.rel (0) target = $region25
    $region24: #{tpu_custom_call.1} parent=1 // pred_region
      %s263 = ssub.s32 256, 128
      %264 = vsyncadd [#allocation3], %s263
      %s265 = sshll.u32 [#allocation2], 4
      %s266 = int_to_ptr.vmem [resolvable:$true] %s265
      %271 = dma.vmem_to_hbm [thread:$0]  %s266, 128, %s5, [#allocation3], 128, 128, 8
    $region25: #{tpu_custom_call.1} parent=1 // pred_fallthru
      _
    // Predicated region
    $region26: #{tpu_custom_call.1} parent=1 // pred_check
      _
    $region27: #{tpu_custom_call.1} parent=1 // pred_check_branch
      %273 = sbr.rel (0) target = $region29
    $region28: #{tpu_custom_call.1} parent=1 // pred_region
      %274 = dma.done [#allocation3], 256
    $region29: #{tpu_custom_call.1} parent=1 // pred_fallthru
      _
    %275 = vsyncpa [#allocation3], 1

</llo_original>
